<compile_context>
chip_gen: v5e
topology: v5e:2x2
jax: 0.10.0
libtpu: 0.0.40
codegen_flags: <defaults>
</compile_context>

<pallas_src>
import functools
import math

import jax
import jax.numpy as jnp
from jax.experimental import pallas as pl
from jax.experimental.pallas import tpu as pltpu

_LANE = 128   # lane width (last dim)
_SUB = 8      # sublane width (second-to-last dim)


def _round_up(x, m):
    return ((x + m - 1) // m) * m


def _cdiv(a, b):
    return (a + b - 1) // b


# --------------------------------------------------------------------------- #
# Kernel
# --------------------------------------------------------------------------- #
def _fused_mlp_kernel(*refs, num_layers, relu_flags):
    """refs = [x_ref, w0, b0, w1, b1, ..., w_{L-1}, b_{L-1}, o_ref].

    The activation `h` stays in vregs/VMEM for the whole layer chain; only the
    final result is written back.  Each dot contracts h's lane axis against the
    weight's sublane axis (weights are [K, N]); bias-add and ReLU run on the
    f32 accumulator, single downcast at the final store.
    """
    x_ref = refs[0]
    o_ref = refs[-1]
    h = x_ref[...]                                      # [TB, K0p]
    for li in range(num_layers):                        # unrolled at trace time
        w = refs[1 + 2 * li][...]                       # [Kp, Np]
        b = refs[2 + 2 * li][...]                       # [1,  Np]
        h = jnp.dot(h, w, preferred_element_type=jnp.float32) + b
        if relu_flags[li]:
            h = jnp.maximum(h, 0.0)
    o_ref[...] = h.astype(o_ref.dtype)


# --------------------------------------------------------------------------- #
# One-time parameter preparation (padding cached across forward calls)
# --------------------------------------------------------------------------- #
def prepare_mlp_params(params, input_size):
    """Zero-pad weights/biases to lane multiples ONCE.  Padding is exact:
    padded K-rows of W and padded bias lanes are zero, and ReLU preserves 0."""
    dims = [input_size] + [w.shape[1] for (w, _) in params]     # K0, N0, N1, ...
    pdims = [_round_up(d, _LANE) for d in dims]
    padded = []
    for li, (w, b) in enumerate(params):
        kp, np_ = pdims[li], pdims[li + 1]
        w_p = jnp.zeros((kp, np_), w.dtype).at[: w.shape[0], : w.shape[1]].set(w)
        b_p = jnp.zeros((1, np_), b.dtype).at[0, : b.shape[0]].set(b)
        padded.append((w_p, b_p))
    return {
        "padded_params": padded,
        "pdims": tuple(pdims),
        "in_features": input_size,
        "out_features": dims[-1],
    }


# --------------------------------------------------------------------------- #
# Tiling / VMEM heuristics
# --------------------------------------------------------------------------- #
def _choose_batch_tiling(batch, max_pdim):
    # Row-tile cap keyed to the padded width: keep the f32 activation chain
    # modest when wide (vreg/spill pressure becomes the binding slot), go
    # bigger when narrow (amortize the ~0.35us per-grid-step overhead).
    if max_pdim >= 1024:
        cap = 128
    elif max_pdim >= 512:
        cap = 256
    else:
        cap = 512
    n_tiles = max(1, _cdiv(batch, cap))
    if batch >= 16 and n_tiles < 2:
        n_tiles = 2          # >=2 tiles so v7x's second TensorCore gets work
    tb = _round_up(_cdiv(batch, n_tiles), _SUB)
    return tb, n_tiles * tb, n_tiles


def _vmem_budget(weight_bytes, tb, pdims, itemsize):
    """Generation-aware VMEM limit derived from the real resident footprint."""
    try:
        phys = pltpu.get_tpu_info().vmem_capacity_bytes
    except Exception:
        phys = 64 * 1024 * 1024          # conservative fallback (v7x per-TC)
    cap = (phys * 3) // 4                # ~48 MiB on v7x, ~96 MiB on v5e/v6e
    io = 2 * tb * (pdims[0] + pdims[-1]) * itemsize   # double-buffered x / out
    act = 2 * tb * max(pdims) * 4                     # f32 activation headroom
    need = weight_bytes + io + act                    # weights single-buffered
    budget = min(cap, max(need * 5 // 4 + (2 << 20), 16 << 20))
    if need > cap:
        # TODO(synk): resident weights exceed this generation's VMEM budget —
        # switch to a K/N-tiled grid (256-aligned tiles on v6e/v7x, 128 on v5e)
        # with a VMEM f32 accumulator and pl.when init/finalize instead of full
        # residency.
        budget = cap
    return int(budget)


# --------------------------------------------------------------------------- #
# Forward
# --------------------------------------------------------------------------- #
def mlp_forward(x, prepared):
    """Fused single-pallas_call MLP forward on pre-padded (cached) params."""
    padded_params = prepared["padded_params"]
    pdims = prepared["pdims"]
    in_f = prepared["in_features"]
    out_f = prepared["out_features"]
    num_layers = len(padded_params)
    # ReLU only after the middle Linears (exact nn.ModuleList ordering).
    relu_flags = tuple(0 < i < num_layers - 1 for i in range(num_layers))

    batch = x.shape[0]
    TB, Bp, n_tiles = _choose_batch_tiling(batch, max(pdims))

    # Single pad op per call (rows + lanes); padded rows/lanes are exact zeros.
    x_p = jnp.pad(x, ((0, Bp - batch), (0, pdims[0] - in_f)))

    inputs = [x_p]
    in_specs = [pl.BlockSpec((TB, pdims[0]), lambda i: (i, 0))]
    flops = 0
    weight_bytes = 0
    for w_p, b_p in padded_params:
        kp, np_ = w_p.shape
        inputs += [w_p, b_p]
        # Constant block index + Buffered(1): a single VMEM copy stays resident
        # across the whole batch grid (no re-DMA, no second buffer).
        in_specs += [
            pl.BlockSpec((kp, np_), lambda i: (0, 0),
                         pipeline_mode=pl.Buffered(1)),
            pl.BlockSpec((1, np_), lambda i: (0, 0),
                         pipeline_mode=pl.Buffered(1)),
        ]
        flops += 2 * Bp * kp * np_
        weight_bytes += (w_p.size * w_p.dtype.itemsize
                         + b_p.size * b_p.dtype.itemsize)

    out_np = pdims[-1]
    itemsize = jnp.dtype(x.dtype).itemsize
    bytes_accessed = weight_bytes + x_p.size * itemsize + Bp * out_np * itemsize
    vmem_limit = _vmem_budget(weight_bytes, TB, pdims, itemsize)

    kernel = functools.partial(
        _fused_mlp_kernel, num_layers=num_layers, relu_flags=relu_flags)

    out_padded = pl.pallas_call(
        kernel,
        out_shape=jax.ShapeDtypeStruct((Bp, out_np), x.dtype),
        grid=(n_tiles,),
        in_specs=in_specs,
        out_specs=pl.BlockSpec((TB, out_np), lambda i: (i, 0)),
        compiler_params=pltpu.CompilerParams(
            dimension_semantics=("parallel",),      # batch tiles shard across TCs
            vmem_limit_bytes=vmem_limit,
        ),
        cost_estimate=pl.CostEstimate(
            flops=flops, transcendentals=0, bytes_accessed=bytes_accessed),
    )(*inputs)

    # TODO(synk): for very large hidden sizes, bf16 weights (keeping the f32
    # accumulator/epilogue) would further halve DMA + residency and ~2-3x MXU
    # throughput on v6e/v7x; kept f32 here to match PyTorch numerics exactly.
    return out_padded[:batch, :out_f]


# --------------------------------------------------------------------------- #
# Parameter init (mirrors nn.Linear's U(-1/sqrt(fan_in), 1/sqrt(fan_in)))
# --------------------------------------------------------------------------- #
def init_mlp_params(key, input_size, hidden_layer_count, hidden_layer_size,
                    output_size):
    """Weights stored pre-transposed as [in_features, out_features]."""
    dims = [(input_size, hidden_layer_size)]
    dims += [(hidden_layer_size, hidden_layer_size)] * (hidden_layer_count - 1)
    dims += [(hidden_layer_size, output_size)]
    params = []
    for (fan_in, fan_out) in dims:
        key, kw, kb = jax.random.split(key, 3)
        bound = 1.0 / math.sqrt(fan_in)
        w = jax.random.uniform(kw, (fan_in, fan_out), jnp.float32, -bound, bound)
        b = jax.random.uniform(kb, (fan_out,), jnp.float32, -bound, bound)
        params.append((w, b))
    return params


if __name__ == "__main__":
    input_size = 32
    hidden_layer_count = 3
    hidden_layer_size = 32
    output_size = 16
    batch = 8

    key = jax.random.PRNGKey(0)
    k_x, k_p = jax.random.split(key)
    x = jax.random.normal(k_x, (batch, input_size), jnp.float32)
    params = init_mlp_params(k_p, input_size, hidden_layer_count,
                             hidden_layer_size, output_size)

    # One-time prepare (padded weights cached across forward calls).
    prepared = prepare_mlp_params(params, input_size)

    out = mlp_forward(x, prepared)
    out = jax.block_until_ready(out)

    # Pure-JAX reference of the identical forward (weights are [in, out]):
    # Linear -> [Linear -> ReLU]*(L-1) -> Linear, no ReLU after first/last.
    ref = x @ params[0][0] + params[0][1]
    for i in range(1, len(params) - 1):
        ref = jnp.maximum(ref @ params[i][0] + params[i][1], 0.0)
    ref = ref @ params[-1][0] + params[-1][1]

    assert out.shape == (batch, output_size)
    assert jnp.allclose(out, ref, atol=1e-4, rtol=1e-4)

    print("KERNEL_OK")
</pallas_src>

<mosaic_0001>
module attributes {stable_mosaic.version = 11 : i64} {
  func.func @_fused_mlp_kernel(%arg0: i32, %arg1: memref<8x128xf32, #tpu.memory_space<vmem>>, %arg2: memref<128x128xf32, #tpu.memory_space<vmem>>, %arg3: memref<1x128xf32, #tpu.memory_space<vmem>>, %arg4: memref<128x128xf32, #tpu.memory_space<vmem>>, %arg5: memref<1x128xf32, #tpu.memory_space<vmem>>, %arg6: memref<128x128xf32, #tpu.memory_space<vmem>>, %arg7: memref<1x128xf32, #tpu.memory_space<vmem>>, %arg8: memref<128x128xf32, #tpu.memory_space<vmem>>, %arg9: memref<1x128xf32, #tpu.memory_space<vmem>>, %arg10: memref<8x128xf32, #tpu.memory_space<vmem>>) attributes {dimension_semantics = [#tpu.dimension_semantics<parallel>], iteration_bounds = array<i64: 1>, scalar_prefetch = 0 : i64, scratch_operands = 0 : i64, tpu.core_type = #tpu.core_type<tc>, window_params = [{transform_indices = @transform_0, window_bounds = array<i64: 8, 128>}, {pipeline_mode = #tpu.pipeline_mode<synchronous>, transform_indices = @transform_1, window_bounds = array<i64: 128, 128>}, {pipeline_mode = #tpu.pipeline_mode<synchronous>, transform_indices = @transform_2, window_bounds = array<i64: 1, 128>}, {pipeline_mode = #tpu.pipeline_mode<synchronous>, transform_indices = @transform_3, window_bounds = array<i64: 128, 128>}, {pipeline_mode = #tpu.pipeline_mode<synchronous>, transform_indices = @transform_4, window_bounds = array<i64: 1, 128>}, {pipeline_mode = #tpu.pipeline_mode<synchronous>, transform_indices = @transform_5, window_bounds = array<i64: 128, 128>}, {pipeline_mode = #tpu.pipeline_mode<synchronous>, transform_indices = @transform_6, window_bounds = array<i64: 1, 128>}, {pipeline_mode = #tpu.pipeline_mode<synchronous>, transform_indices = @transform_7, window_bounds = array<i64: 128, 128>}, {pipeline_mode = #tpu.pipeline_mode<synchronous>, transform_indices = @transform_8, window_bounds = array<i64: 1, 128>}, {transform_indices = @transform_9, window_bounds = array<i64: 8, 128>}]} {
    %c0 = arith.constant 0 : index
    %c0_0 = arith.constant 0 : index
    %0 = vector.load %arg1[%c0, %c0_0] : memref<8x128xf32, #tpu.memory_space<vmem>>, vector<8x128xf32>
    %c0_1 = arith.constant 0 : index
    %c0_2 = arith.constant 0 : index
    %1 = vector.load %arg2[%c0_1, %c0_2] : memref<128x128xf32, #tpu.memory_space<vmem>>, vector<128x128xf32>
    %c0_3 = arith.constant 0 : index
    %c0_4 = arith.constant 0 : index
    %2 = vector.load %arg3[%c0_3, %c0_4] : memref<1x128xf32, #tpu.memory_space<vmem>>, vector<1x128xf32>
    %cst = arith.constant dense<0.000000e+00> : vector<8x128xf32>
    %3 = tpu.matmul %0, %1, %cst {dimension_numbers = #tpu.dot_dimension_numbers<[1], [0], [0], [1], [0, 0, 1, 1], [], []>} : vector<8x128xf32>, vector<128x128xf32>, vector<8x128xf32> -> vector<8x128xf32>
    %4 = vector.broadcast %2 : vector<1x128xf32> to vector<8x128xf32>
    %5 = arith.addf %3, %4 : vector<8x128xf32>
    %c0_5 = arith.constant 0 : index
    %c0_6 = arith.constant 0 : index
    %6 = vector.load %arg4[%c0_5, %c0_6] : memref<128x128xf32, #tpu.memory_space<vmem>>, vector<128x128xf32>
    %c0_7 = arith.constant 0 : index
    %c0_8 = arith.constant 0 : index
    %7 = vector.load %arg5[%c0_7, %c0_8] : memref<1x128xf32, #tpu.memory_space<vmem>>, vector<1x128xf32>
    %cst_9 = arith.constant dense<0.000000e+00> : vector<8x128xf32>
    %8 = tpu.matmul %5, %6, %cst_9 {dimension_numbers = #tpu.dot_dimension_numbers<[1], [0], [0], [1], [0, 0, 1, 1], [], []>} : vector<8x128xf32>, vector<128x128xf32>, vector<8x128xf32> -> vector<8x128xf32>
    %9 = vector.broadcast %7 : vector<1x128xf32> to vector<8x128xf32>
    %10 = arith.addf %8, %9 : vector<8x128xf32>
    %cst_10 = arith.constant 0.000000e+00 : f32
    %11 = vector.broadcast %cst_10 : f32 to vector<8x128xf32>
    %12 = arith.maximumf %10, %11 : vector<8x128xf32>
    %c0_11 = arith.constant 0 : index
    %c0_12 = arith.constant 0 : index
    %13 = vector.load %arg6[%c0_11, %c0_12] : memref<128x128xf32, #tpu.memory_space<vmem>>, vector<128x128xf32>
    %c0_13 = arith.constant 0 : index
    %c0_14 = arith.constant 0 : index
    %14 = vector.load %arg7[%c0_13, %c0_14] : memref<1x128xf32, #tpu.memory_space<vmem>>, vector<1x128xf32>
    %cst_15 = arith.constant dense<0.000000e+00> : vector<8x128xf32>
    %15 = tpu.matmul %12, %13, %cst_15 {dimension_numbers = #tpu.dot_dimension_numbers<[1], [0], [0], [1], [0, 0, 1, 1], [], []>} : vector<8x128xf32>, vector<128x128xf32>, vector<8x128xf32> -> vector<8x128xf32>
    %16 = vector.broadcast %14 : vector<1x128xf32> to vector<8x128xf32>
    %17 = arith.addf %15, %16 : vector<8x128xf32>
    %cst_16 = arith.constant 0.000000e+00 : f32
    %18 = vector.broadcast %cst_16 : f32 to vector<8x128xf32>
    %19 = arith.maximumf %17, %18 : vector<8x128xf32>
    %c0_17 = arith.constant 0 : index
    %c0_18 = arith.constant 0 : index
    %20 = vector.load %arg8[%c0_17, %c0_18] : memref<128x128xf32, #tpu.memory_space<vmem>>, vector<128x128xf32>
    %c0_19 = arith.constant 0 : index
    %c0_20 = arith.constant 0 : index
    %21 = vector.load %arg9[%c0_19, %c0_20] : memref<1x128xf32, #tpu.memory_space<vmem>>, vector<1x128xf32>
    %cst_21 = arith.constant dense<0.000000e+00> : vector<8x128xf32>
    %22 = tpu.matmul %19, %20, %cst_21 {dimension_numbers = #tpu.dot_dimension_numbers<[1], [0], [0], [1], [0, 0, 1, 1], [], []>} : vector<8x128xf32>, vector<128x128xf32>, vector<8x128xf32> -> vector<8x128xf32>
    %23 = vector.broadcast %21 : vector<1x128xf32> to vector<8x128xf32>
    %24 = arith.addf %22, %23 : vector<8x128xf32>
    %c0_22 = arith.constant 0 : index
    %c0_23 = arith.constant 0 : index
    %25 = vector.load %arg10[%c0_22, %c0_23] : memref<8x128xf32, #tpu.memory_space<vmem>>, vector<8x128xf32>
    tpu.vector_store %arg10[%c0_22, %c0_23], %24 {strides = array<i32>} : memref<8x128xf32, #tpu.memory_space<vmem>>, vector<8x128xf32>,
    return
  }
  func.func @transform_0(%arg0: i32) -> (i32, i32) {
    %c0_i32 = arith.constant 0 : i32
    %c0_i32_0 = arith.constant 0 : i32
    return %arg0, %c0_i32 : i32, i32
  }
  func.func @transform_1(%arg0: i32) -> (i32, i32) {
    %c0_i32 = arith.constant 0 : i32
    %c0_i32_0 = arith.constant 0 : i32
    %c0_i32_1 = arith.constant 0 : i32
    return %c0_i32, %c0_i32_0 : i32, i32
  }
  func.func @transform_2(%arg0: i32) -> (i32, i32) {
    %c0_i32 = arith.constant 0 : i32
    %c0_i32_0 = arith.constant 0 : i32
    %c0_i32_1 = arith.constant 0 : i32
    return %c0_i32, %c0_i32_0 : i32, i32
  }
  func.func @transform_3(%arg0: i32) -> (i32, i32) {
    %c0_i32 = arith.constant 0 : i32
    %c0_i32_0 = arith.constant 0 : i32
    %c0_i32_1 = arith.constant 0 : i32
    return %c0_i32, %c0_i32_0 : i32, i32
  }
  func.func @transform_4(%arg0: i32) -> (i32, i32) {
    %c0_i32 = arith.constant 0 : i32
    %c0_i32_0 = arith.constant 0 : i32
    %c0_i32_1 = arith.constant 0 : i32
    return %c0_i32, %c0_i32_0 : i32, i32
  }
  func.func @transform_5(%arg0: i32) -> (i32, i32) {
    %c0_i32 = arith.constant 0 : i32
    %c0_i32_0 = arith.constant 0 : i32
    %c0_i32_1 = arith.constant 0 : i32
    return %c0_i32, %c0_i32_0 : i32, i32
  }
  func.func @transform_6(%arg0: i32) -> (i32, i32) {
    %c0_i32 = arith.constant 0 : i32
    %c0_i32_0 = arith.constant 0 : i32
    %c0_i32_1 = arith.constant 0 : i32
    return %c0_i32, %c0_i32_0 : i32, i32
  }
  func.func @transform_7(%arg0: i32) -> (i32, i32) {
    %c0_i32 = arith.constant 0 : i32
    %c0_i32_0 = arith.constant 0 : i32
    %c0_i32_1 = arith.constant 0 : i32
    return %c0_i32, %c0_i32_0 : i32, i32
  }
  func.func @transform_8(%arg0: i32) -> (i32, i32) {
    %c0_i32 = arith.constant 0 : i32
    %c0_i32_0 = arith.constant 0 : i32
    %c0_i32_1 = arith.constant 0 : i32
    return %c0_i32, %c0_i32_0 : i32, i32
  }
  func.func @transform_9(%arg0: i32) -> (i32, i32) {
    %c0_i32 = arith.constant 0 : i32
    %c0_i32_0 = arith.constant 0 : i32
    return %arg0, %c0_i32 : i32, i32
  }
}

</mosaic_0001>

<llo_original>
// kernel: tpu_custom_call.1
$region0: #{tpu_custom_call.1}
  #allocation0 [shape = 'u32[]', space=smem, size = 0x4, offset = 0x4, fixed_abs, tag = 'smem constant byte address 0x4 - core index']
  #allocation1 [shape = 'u32[72,128]{1,0:T(1,128)}', space=vmem, size = 0x9000, scoped, tag = 'internal scratch']
  %s0 = inlined_call_operand.hbm [shape: f32[8,128], index: 0, kind: input, shape index: {}]
  %s1 = inlined_call_operand.hbm [shape: f32[128,128], index: 1, kind: input, shape index: {}]
  %s2 = inlined_call_operand.vmem [shape: f32[1,128], index: 2, kind: input, shape index: {}]
  %s3 = inlined_call_operand.hbm [shape: f32[128,128], index: 3, kind: input, shape index: {}]
  %s4 = inlined_call_operand.vmem [shape: f32[1,128], index: 4, kind: input, shape index: {}]
  %s5 = inlined_call_operand.hbm [shape: f32[128,128], index: 5, kind: input, shape index: {}]
  %s6 = inlined_call_operand.vmem [shape: f32[1,128], index: 6, kind: input, shape index: {}]
  %s7 = inlined_call_operand.hbm [shape: f32[128,128], index: 7, kind: input, shape index: {}]
  %s8 = inlined_call_operand.vmem [shape: f32[1,128], index: 8, kind: input, shape index: {}]
  %s9 = inlined_call_operand.hbm [shape: f32[8,128], index: 9, kind: output, shape index: {}]
  %s10 = sld [smem:[#allocation0]]
  $region66: #{tpu_custom_call.1} parent=0
    _
  %s12 = ssub.s32 1, %s10
  %s13 = scalar_select 0, %s12, %s10
  $region1: #{tpu_custom_call.1} parent=0
    #allocation2 [shape = 'u8[4096]{0}', space=vmem, size = 0x1000, scoped, tag = 'input window, operand 0, single buffered']
    #allocation3 [shape = 's32[1]{0}', space=sflag, size = 0x4, scoped, tag = 'scoped memory for tpu_custom_call.1']
    #allocation4 [shape = 's32[1]{0}', space=sflag, size = 0x4, scoped, tag = 'scoped memory for tpu_custom_call.1']
    #allocation5 [shape = 'u8[65536]{0}', space=vmem, size = 0x10000, scoped, tag = 'input window, operand 1, single buffered']
    #allocation6 [shape = 's32[1]{0}', space=sflag, size = 0x4, scoped, tag = 'scoped memory for tpu_custom_call.1']
    #allocation7 [shape = 'u8[65536]{0}', space=vmem, size = 0x10000, scoped, tag = 'input window, operand 3, single buffered']
    #allocation8 [shape = 'u8[65536]{0}', space=vmem, size = 0x10000, scoped, tag = 'input window, operand 5, single buffered']
    #allocation9 [shape = 's32[1]{0}', space=sflag, size = 0x4, scoped, tag = 'scoped memory for tpu_custom_call.1']
    #allocation10 [shape = 'u8[65536]{0}', space=vmem, size = 0x10000, scoped, tag = 'input window, operand 7, single buffered']
    #allocation11 [shape = 'u8[4096]{0}', space=vmem, size = 0x1000, scoped, tag = 'output window, operand 0, single buffered']
    %14 = vsyncpa [#allocation3], 0
    %15 = vsyncpa [#allocation6], 0
    %16 = vsyncpa [#allocation9], 0
    %17 = vsyncpa [#allocation4], 0
    // Predicated region
    $region2: #{tpu_custom_call.1} parent=1 // pred_check
      _
    $region3: #{tpu_custom_call.1} parent=1 // pred_check_branch
      %19 = sbr.rel (0) target = $region5
    $region4: #{tpu_custom_call.1} parent=1 // pred_region
      %21 = vsyncadd [#allocation3], 0
      %s23 = sshll.u32 %s0, 4
      %s24 = int_to_ptr.hbm [resolvable:$true] %s23
      %s25 = sshll.u32 [#allocation2], 4
      %s26 = int_to_ptr.vmem [resolvable:$true] %s25
      %28 = dma.hbm_to_vmem [thread:$0]  %s24, 128, %s26, [#allocation3]
    $region5: #{tpu_custom_call.1} parent=1 // pred_fallthru
      _
    // Predicated region
    $region6: #{tpu_custom_call.1} parent=1 // pred_check
      _
    $region7: #{tpu_custom_call.1} parent=1 // pred_check_branch
      %30 = sbr.rel (0) target = $region9
    $region8: #{tpu_custom_call.1} parent=1 // pred_region
      %32 = vsyncadd [#allocation6], 0
      %s33 = sshll.u32 %s1, 4
      %s34 = int_to_ptr.hbm [resolvable:$true] %s33
      %s35 = sshll.u32 [#allocation5], 4
      %s36 = int_to_ptr.vmem [resolvable:$true] %s35
      %41 = dma.hbm_to_vmem [thread:$0]  %s34, 2048, %s36, [#allocation6], 128, 128, 8
    $region9: #{tpu_custom_call.1} parent=1 // pred_fallthru
      _
    // Predicated region
    $region10: #{tpu_custom_call.1} parent=1 // pred_check
      _
    $region11: #{tpu_custom_call.1} parent=1 // pred_check_branch
      %43 = sbr.rel (0) target = $region13
    $region12: #{tpu_custom_call.1} parent=1 // pred_region
      _
    $region13: #{tpu_custom_call.1} parent=1 // pred_fallthru
      _
    // Predicated region
    $region14: #{tpu_custom_call.1} parent=1 // pred_check
      _
    $region15: #{tpu_custom_call.1} parent=1 // pred_check_branch
      %45 = sbr.rel (0) target = $region17
    $region16: #{tpu_custom_call.1} parent=1 // pred_region
      %47 = vsyncadd [#allocation6], 0
      %s48 = sshll.u32 %s3, 4
      %s49 = int_to_ptr.hbm [resolvable:$true] %s48
      %s50 = sshll.u32 [#allocation7], 4
      %s51 = int_to_ptr.vmem [resolvable:$true] %s50
      %56 = dma.hbm_to_vmem [thread:$0]  %s49, 2048, %s51, [#allocation6], 128, 128, 8
    $region17: #{tpu_custom_call.1} parent=1 // pred_fallthru
      _
    // Predicated region
    $region18: #{tpu_custom_call.1} parent=1 // pred_check
      _
    $region19: #{tpu_custom_call.1} parent=1 // pred_check_branch
      %58 = sbr.rel (0) target = $region21
    $region20: #{tpu_custom_call.1} parent=1 // pred_region
      _
    $region21: #{tpu_custom_call.1} parent=1 // pred_fallthru
      _
    // Predicated region
    $region22: #{tpu_custom_call.1} parent=1 // pred_check
      _
    $region23: #{tpu_custom_call.1} parent=1 // pred_check_branch
      %60 = sbr.rel (0) target = $region25
    $region24: #{tpu_custom_call.1} parent=1 // pred_region
      %62 = vsyncadd [#allocation9], 0
      %s63 = sshll.u32 %s5, 4
      %s64 = int_to_ptr.hbm [resolvable:$true] %s63
      %s65 = sshll.u32 [#allocation8], 4
      %s66 = int_to_ptr.vmem [resolvable:$true] %s65
      %71 = dma.hbm_to_vmem [thread:$0]  %s64, 2048, %s66, [#allocation9], 128, 128, 8
    $region25: #{tpu_custom_call.1} parent=1 // pred_fallthru
      _
    // Predicated region
    $region26: #{tpu_custom_call.1} parent=1 // pred_check
      _
    $region27: #{tpu_custom_call.1} parent=1 // pred_check_branch
      %73 = sbr.rel (0) target = $region29
    $region28: #{tpu_custom_call.1} parent=1 // pred_region
      _
    $region29: #{tpu_custom_call.1} parent=1 // pred_fallthru
      _
    // Predicated region
    $region30: #{tpu_custom_call.1} parent=1 // pred_check
      _
    $region31: #{tpu_custom_call.1} parent=1 // pred_check_branch
      %75 = sbr.rel (0) target = $region33
    $region32: #{tpu_custom_call.1} parent=1 // pred_region
      %77 = vsyncadd [#allocation9], 0
      %s78 = sshll.u32 %s7, 4
      %s79 = int_to_ptr.hbm [resolvable:$true] %s78
      %s80 = sshll.u32 [#allocation10], 4
      %s81 = int_to_ptr.vmem [resolvable:$true] %s80
      %86 = dma.hbm_to_vmem [thread:$0]  %s79, 2048, %s81, [#allocation9], 128, 128, 8
    $region33: #{tpu_custom_call.1} parent=1 // pred_fallthru
      _
    // Predicated region
    $region34: #{tpu_custom_call.1} parent=1 // pred_check
      _
    $region35: #{tpu_custom_call.1} parent=1 // pred_check_branch
      %88 = sbr.rel (0) target = $region37
    $region36: #{tpu_custom_call.1} parent=1 // pred_region
      _
    $region37: #{tpu_custom_call.1} parent=1 // pred_fallthru
      _
    // Predicated region
    $region38: #{tpu_custom_call.1} parent=1 // pred_check
      _
    $region39: #{tpu_custom_call.1} parent=1 // pred_check_branch
      %90 = sbr.rel (0) target = $region41
    $region40: #{tpu_custom_call.1} parent=1 // pred_region
      %92 = dma.done [#allocation3], 128
    $region41: #{tpu_custom_call.1} parent=1 // pred_fallthru
      _
    // Predicated region
    $region42: #{tpu_custom_call.1} parent=1 // pred_check
      _
    $region43: #{tpu_custom_call.1} parent=1 // pred_check_branch
      %94 = sbr.rel (0) target = $region45
    $region44: #{tpu_custom_call.1} parent=1 // pred_region
      %96 = dma.done [#allocation6], 2048
    $region45: #{tpu_custom_call.1} parent=1 // pred_fallthru
      _
    // Predicated region
    $region46: #{tpu_custom_call.1} parent=1 // pred_check
      _
    $region47: #{tpu_custom_call.1} parent=1 // pred_check_branch
      %98 = sbr.rel (0) target = $region49
    $region48: #{tpu_custom_call.1} parent=1 // pred_region
      %100 = dma.done [#allocation6], 2048
    $region49: #{tpu_custom_call.1} parent=1 // pred_fallthru
      _
    // Predicated region
    $region50: #{tpu_custom_call.1} parent=1 // pred_check
      _
    $region51: #{tpu_custom_call.1} parent=1 // pred_check_branch
      %102 = sbr.rel (0) target = $region53
    $region52: #{tpu_custom_call.1} parent=1 // pred_region
      %104 = dma.done [#allocation9], 2048
    $region53: #{tpu_custom_call.1} parent=1 // pred_fallthru
      _
    // Predicated region
    $region54: #{tpu_custom_call.1} parent=1 // pred_check
      _
    $region55: #{tpu_custom_call.1} parent=1 // pred_check_branch
      %106 = sbr.rel (0) target = $region57
    $region56: #{tpu_custom_call.1} parent=1 // pred_region
      %108 = dma.done [#allocation9], 2048
    $region57: #{tpu_custom_call.1} parent=1 // pred_fallthru
      _
    %v109 = vld [vmem:[#allocation2] sm:$0xff]
    %v110 = vld [vmem:[#allocation5] sm:$0xff]
    %v111 = vld [vmem:[#allocation5 + $0x8] sm:$0xff]
    %v112 = vld [vmem:[#allocation5 + $0x10] sm:$0xff]
    %v113 = vld [vmem:[#allocation5 + $0x18] sm:$0xff]
    %v114 = vld [vmem:[#allocation5 + $0x20] sm:$0xff]
    %v115 = vld [vmem:[#allocation5 + $0x28] sm:$0xff]
    %v116 = vld [vmem:[#allocation5 + $0x30] sm:$0xff]
    %v117 = vld [vmem:[#allocation5 + $0x38] sm:$0xff]
    %v118 = vld [vmem:[#allocation5 + $0x40] sm:$0xff]
    %v119 = vld [vmem:[#allocation5 + $0x48] sm:$0xff]
    %v120 = vld [vmem:[#allocation5 + $0x50] sm:$0xff]
    %v121 = vld [vmem:[#allocation5 + $0x58] sm:$0xff]
    %v122 = vld [vmem:[#allocation5 + $0x60] sm:$0xff]
    %v123 = vld [vmem:[#allocation5 + $0x68] sm:$0xff]
    %v124 = vld [vmem:[#allocation5 + $0x70] sm:$0xff]
    %v125 = vld [vmem:[#allocation5 + $0x78] sm:$0xff]
    %v126 = vld [vmem:[%s2] sm:$0x1]
    %v128 = vperm.slane %v126, 0
    %130 = vmatpush.msra.mxu0 %v125
    %131 = vmatpush.msra.mxu0 %v124
    %132 = vmatpush.msra.mxu0 %v123
    %133 = vmatpush.msra.mxu0 %v122
    %134 = vmatpush.msra.mxu0 %v121
    %135 = vmatpush.msra.mxu0 %v120
    %136 = vmatpush.msra.mxu0 %v119
    %137 = vmatpush.msra.mxu0 %v118
    %138 = vmatpush.msra.mxu0 %v117
    %139 = vmatpush.msra.mxu0 %v116
    %140 = vmatpush.msra.mxu0 %v115
    %141 = vmatpush.msra.mxu0 %v114
    %142 = vmatpush.msra.mxu0 %v113
    %143 = vmatpush.msra.mxu0 %v112
    %144 = vmatpush.msra.mxu0 %v111
    %145 = vmatpush.msra.mxu0 %v110
    %146 = vmatmul.f32.gmra.mxu0 %v109
    %v147 = vpop.f32.mrf.mxu0
    %v148 = vadd.f32 %v128, %v147
    %149 = vdwg.mxu0
    %v150 = vld [vmem:[#allocation7] sm:$0xff]
    %v151 = vld [vmem:[#allocation7 + $0x8] sm:$0xff]
    %v152 = vld [vmem:[#allocation7 + $0x10] sm:$0xff]
    %v153 = vld [vmem:[#allocation7 + $0x18] sm:$0xff]
    %v154 = vld [vmem:[#allocation7 + $0x20] sm:$0xff]
    %v155 = vld [vmem:[#allocation7 + $0x28] sm:$0xff]
    %v156 = vld [vmem:[#allocation7 + $0x30] sm:$0xff]
    %v157 = vld [vmem:[#allocation7 + $0x38] sm:$0xff]
    %v158 = vld [vmem:[#allocation7 + $0x40] sm:$0xff]
    %v159 = vld [vmem:[#allocation7 + $0x48] sm:$0xff]
    %v160 = vld [vmem:[#allocation7 + $0x50] sm:$0xff]
    %v161 = vld [vmem:[#allocation7 + $0x58] sm:$0xff]
    %v162 = vld [vmem:[#allocation7 + $0x60] sm:$0xff]
    %v163 = vld [vmem:[#allocation7 + $0x68] sm:$0xff]
    %v164 = vld [vmem:[#allocation7 + $0x70] sm:$0xff]
    %v165 = vld [vmem:[#allocation7 + $0x78] sm:$0xff]
    %v166 = vld [vmem:[%s4] sm:$0x1]
    %v168 = vperm.slane %v166, 0
    %170 = vmatpush.msra.mxu0 %v165
    %171 = vmatpush.msra.mxu0 %v164
    %172 = vmatpush.msra.mxu0 %v163
    %173 = vmatpush.msra.mxu0 %v162
    %174 = vmatpush.msra.mxu0 %v161
    %175 = vmatpush.msra.mxu0 %v160
    %176 = vmatpush.msra.mxu0 %v159
    %177 = vmatpush.msra.mxu0 %v158
    %178 = vmatpush.msra.mxu0 %v157
    %179 = vmatpush.msra.mxu0 %v156
    %180 = vmatpush.msra.mxu0 %v155
    %181 = vmatpush.msra.mxu0 %v154
    %182 = vmatpush.msra.mxu0 %v153
    %183 = vmatpush.msra.mxu0 %v152
    %184 = vmatpush.msra.mxu0 %v151
    %185 = vmatpush.msra.mxu0 %v150
    %186 = vmatmul.f32.gmra.mxu0 %v148
    %v187 = vpop.f32.mrf.mxu0
    %v188 = vadd.f32 %v168, %v187
    %189 = vdwg.mxu0
    %v190 = vmax.f32 %v188, 0.0
    %v191 = vld [vmem:[#allocation8] sm:$0xff]
    %v192 = vld [vmem:[#allocation8 + $0x8] sm:$0xff]
    %v193 = vld [vmem:[#allocation8 + $0x10] sm:$0xff]
    %v194 = vld [vmem:[#allocation8 + $0x18] sm:$0xff]
    %v195 = vld [vmem:[#allocation8 + $0x20] sm:$0xff]
    %v196 = vld [vmem:[#allocation8 + $0x28] sm:$0xff]
    %v197 = vld [vmem:[#allocation8 + $0x30] sm:$0xff]
    %v198 = vld [vmem:[#allocation8 + $0x38] sm:$0xff]
    %v199 = vld [vmem:[#allocation8 + $0x40] sm:$0xff]
    %v200 = vld [vmem:[#allocation8 + $0x48] sm:$0xff]
    %v201 = vld [vmem:[#allocation8 + $0x50] sm:$0xff]
    %v202 = vld [vmem:[#allocation8 + $0x58] sm:$0xff]
    %v203 = vld [vmem:[#allocation8 + $0x60] sm:$0xff]
    %v204 = vld [vmem:[#allocation8 + $0x68] sm:$0xff]
    %v205 = vld [vmem:[#allocation8 + $0x70] sm:$0xff]
    %v206 = vld [vmem:[#allocation8 + $0x78] sm:$0xff]
    %v207 = vld [vmem:[%s6] sm:$0x1]
    %v209 = vperm.slane %v207, 0
    %211 = vmatpush.msra.mxu0 %v206
    %212 = vmatpush.msra.mxu0 %v205
    %213 = vmatpush.msra.mxu0 %v204
    %214 = vmatpush.msra.mxu0 %v203
    %215 = vmatpush.msra.mxu0 %v202
    %216 = vmatpush.msra.mxu0 %v201
    %217 = vmatpush.msra.mxu0 %v200
    %218 = vmatpush.msra.mxu0 %v199
    %219 = vmatpush.msra.mxu0 %v198
    %220 = vmatpush.msra.mxu0 %v197
    %221 = vmatpush.msra.mxu0 %v196
    %222 = vmatpush.msra.mxu0 %v195
    %223 = vmatpush.msra.mxu0 %v194
    %224 = vmatpush.msra.mxu0 %v193
    %225 = vmatpush.msra.mxu0 %v192
    %226 = vmatpush.msra.mxu0 %v191
    %227 = vmatmul.f32.gmra.mxu0 %v190
    %v228 = vpop.f32.mrf.mxu0
    %v229 = vadd.f32 %v209, %v228
    %230 = vdwg.mxu0
    %v231 = vmax.f32 %v229, 0.0
    %v232 = vld [vmem:[#allocation10] sm:$0xff]
    %v233 = vld [vmem:[#allocation10 + $0x8] sm:$0xff]
    %v234 = vld [vmem:[#allocation10 + $0x10] sm:$0xff]
    %v235 = vld [vmem:[#allocation10 + $0x18] sm:$0xff]
    %v236 = vld [vmem:[#allocation10 + $0x20] sm:$0xff]
    %v237 = vld [vmem:[#allocation10 + $0x28] sm:$0xff]
    %v238 = vld [vmem:[#allocation10 + $0x30] sm:$0xff]
    %v239 = vld [vmem:[#allocation10 + $0x38] sm:$0xff]
    %v240 = vld [vmem:[#allocation10 + $0x40] sm:$0xff]
    %v241 = vld [vmem:[#allocation10 + $0x48] sm:$0xff]
    %v242 = vld [vmem:[#allocation10 + $0x50] sm:$0xff]
    %v243 = vld [vmem:[#allocation10 + $0x58] sm:$0xff]
    %v244 = vld [vmem:[#allocation10 + $0x60] sm:$0xff]
    %v245 = vld [vmem:[#allocation10 + $0x68] sm:$0xff]
    %v246 = vld [vmem:[#allocation10 + $0x70] sm:$0xff]
    %v247 = vld [vmem:[#allocation10 + $0x78] sm:$0xff]
    %v248 = vld [vmem:[%s8] sm:$0x1]
    %v250 = vperm.slane %v248, 0
    %252 = vmatpush.msra.mxu0 %v247
    %253 = vmatpush.msra.mxu0 %v246
    %254 = vmatpush.msra.mxu0 %v245
    %255 = vmatpush.msra.mxu0 %v244
    %256 = vmatpush.msra.mxu0 %v243
    %257 = vmatpush.msra.mxu0 %v242
    %258 = vmatpush.msra.mxu0 %v241
    %259 = vmatpush.msra.mxu0 %v240
    %260 = vmatpush.msra.mxu0 %v239
    %261 = vmatpush.msra.mxu0 %v238
    %262 = vmatpush.msra.mxu0 %v237
    %263 = vmatpush.msra.mxu0 %v236
    %264 = vmatpush.msra.mxu0 %v235
    %265 = vmatpush.msra.mxu0 %v234
    %266 = vmatpush.msra.mxu0 %v233
    %267 = vmatpush.msra.mxu0 %v232
    %268 = vmatmul.f32.gmra.mxu0 %v231
    %v269 = vpop.f32.mrf.mxu0
    %v270 = vadd.f32 %v250, %v269
    %271 = vdwg.mxu0
    %272 = vst [vmem:[#allocation11] sm:$0xff] %v270
    // Predicated region
    $region58: #{tpu_custom_call.1} parent=1 // pred_check
      _
    $region59: #{tpu_custom_call.1} parent=1 // pred_check_branch
      %274 = sbr.rel (0) target = $region61
    $region60: #{tpu_custom_call.1} parent=1 // pred_region
      %276 = vsyncadd [#allocation4], 0
      %s278 = sshll.u32 [#allocation11], 4
      %s279 = int_to_ptr.vmem [resolvable:$true] %s278
      %s280 = sshll.u32 %s9, 4
      %s281 = int_to_ptr.hbm [resolvable:$true] %s280
      %283 = dma.vmem_to_hbm [thread:$0]  %s279, 128, %s281, [#allocation4]
    $region61: #{tpu_custom_call.1} parent=1 // pred_fallthru
      _
    // Predicated region
    $region62: #{tpu_custom_call.1} parent=1 // pred_check
      _
    $region63: #{tpu_custom_call.1} parent=1 // pred_check_branch
      %285 = sbr.rel (0) target = $region65
    $region64: #{tpu_custom_call.1} parent=1 // pred_region
      %287 = dma.done [#allocation4], 128
    $region65: #{tpu_custom_call.1} parent=1 // pred_fallthru
      _
    %288 = vsyncpa [#allocation3], 1
    %289 = vsyncpa [#allocation6], 1
    %290 = vsyncpa [#allocation9], 1
    %291 = vsyncpa [#allocation4], 1

</llo_original>
